<compile_context>
chip_gen: v6e
topology: v6e:2x2x1
jax: 0.10.0
libtpu: 0.0.40
codegen_flags: <defaults>
</compile_context>

<pallas_src>
import functools

import jax
import jax.numpy as jnp
from jax.experimental import pallas as pl
from jax.experimental.pallas import tpu as pltpu


def _round_up(v, m):
    return -(-v // m) * m


def _chomp_kernel(x_ref, o_ref, *, start, t_out):
    # Pure copy of the kept column window; lowers to at most a lane shift.
    o_ref[...] = x_ref[:, pl.ds(start, t_out)]


def chomp1d(x, chomp_size, symmetric_chomp, *, block_rows=None,
            vmem_budget_bytes=16 << 20):
    """Pallas implementation of Chomp1d.forward. x has shape (N, C, T)."""
    if x.ndim != 3:
        raise ValueError(f"Chomp1d expects a (N, C, T) input, got shape {x.shape}")
    if symmetric_chomp and chomp_size % 2 != 0:
        raise ValueError("If symmetric chomp, chomp size needs to be even")
    if chomp_size < 0:
        raise ValueError(f"chomp_size must be non-negative, got {chomp_size}")
    if chomp_size == 0:
        return x

    n, c, t = x.shape
    if chomp_size >= t:
        raise ValueError(f"chomp_size={chomp_size} must be < time dim T={t}")

    t_out = t - chomp_size
    start = (chomp_size // 2) if symmetric_chomp else 0

    rows = n * c
    x2 = x.reshape(rows, t)  # free for contiguous NCT layout
    itemsize = jnp.dtype(x.dtype).itemsize

    # Causal chomp with a lane-aligned kept width can read exactly the kept
    # columns; otherwise read full-T blocks and slice in-kernel.
    exact = (start == 0) and (t_out % 128 == 0)
    in_cols = t_out if exact else t

    # VMEM-padded per-row footprint of one (input + output) block pair.
    lanes_in = _round_up(in_cols, 128)
    lanes_out = _round_up(t_out, 128)
    per_row_bytes = (lanes_in + lanes_out) * itemsize

    row_pack = max(8, 32 // itemsize)  # sublane packing: f32->8, bf16->16, int8->32
    if block_rows is None:
        # Double-buffered (input + output) blocks must fit the VMEM budget.
        fit = max(32, (vmem_budget_bytes // (2 * per_row_bytes)) // 32 * 32)
        # Keep >= 4 grid steps on large inputs so the "parallel" grid axis can
        # be sharded across both v7x TensorCores.
        if rows >= 4 * 32:
            fit = min(fit, _round_up(-(-rows // 4), 32))
        block_rows = fit
    block_rows = int(block_rows)
    if block_rows >= rows:
        block_rows = rows  # spans whole row axis -> no sublane-alignment need
    else:
        block_rows = max(row_pack, (block_rows // row_pack) * row_pack)

    grid = (pl.cdiv(rows, block_rows),)
    # Explicit scoped-VMEM limit: double-buffered blocks + slack, never below
    # the smallest per-chip default (16 MiB on v5e).
    vmem_limit = int(max(2 * block_rows * per_row_bytes + (2 << 20), 16 << 20))

    kernel = functools.partial(_chomp_kernel, start=start, t_out=t_out)

    out2 = pl.pallas_call(
        kernel,
        out_shape=jax.ShapeDtypeStruct((rows, t_out), x.dtype),
        grid=grid,
        in_specs=[pl.BlockSpec((block_rows, in_cols), lambda i: (i, 0))],
        out_specs=pl.BlockSpec((block_rows, t_out), lambda i: (i, 0)),
        compiler_params=pltpu.CompilerParams(
            dimension_semantics=("parallel",),
            vmem_limit_bytes=vmem_limit),
    )(x2)
    return out2.reshape(n, c, t_out)


if __name__ == "__main__":
    key = jax.random.PRNGKey(0)
    k1, k2, k3, k4 = jax.random.split(key, 4)

    N, C, T = 2, 4, 16
    cs = 4
    x = jax.random.normal(k1, (N, C, T), dtype=jnp.float32)

    # Case 1: symmetric chomp
    out_sym = chomp1d(x, cs, True)
    jax.block_until_ready(out_sym)
    assert out_sym.shape == (N, C, T - cs)
    assert jnp.array_equal(out_sym, x[:, :, cs // 2: -(cs // 2)])

    # Case 2: causal (non-symmetric) chomp
    out_causal = chomp1d(x, cs, False)
    jax.block_until_ready(out_causal)
    assert out_causal.shape == (N, C, T - cs)
    assert jnp.array_equal(out_causal, x[:, :, :-cs])

    # Case 3: chomp_size == 0 -> identity
    out_id = chomp1d(x, 0, False)
    jax.block_until_ready(out_id)
    assert jnp.array_equal(out_id, x)

    # Case 4: multi-step grid with a partial boundary row-block (rows=15)
    x_tail = jax.random.normal(k2, (3, 5, T), dtype=jnp.float32)
    out_tail = chomp1d(x_tail, cs, True, block_rows=8)  # grid=(2,), tail of 7 rows
    jax.block_until_ready(out_tail)
    assert jnp.array_equal(out_tail, x_tail[:, :, cs // 2: -(cs // 2)])

    # Case 5: bf16 dtype (pure copy -> bit exact)
    xb = x.astype(jnp.bfloat16)
    out_bf16 = chomp1d(xb, cs, False)
    jax.block_until_ready(out_bf16)
    assert jnp.array_equal(out_bf16, xb[:, :, :-cs])

    # Case 6: exact causal path (t_out % 128 == 0), auto-sized multi-step grid
    x6 = jax.random.normal(k3, (4, 64, 160), dtype=jnp.float32)
    out6 = chomp1d(x6, 32, False)
    jax.block_until_ready(out6)
    assert jnp.array_equal(out6, x6[:, :, :-32])

    # Case 7: symmetric path, auto-sized multi-step grid with lane shift
    x7 = jax.random.normal(k4, (2, 64, 200), dtype=jnp.float32)
    out7 = chomp1d(x7, 8, True)
    jax.block_until_ready(out7)
    assert jnp.array_equal(out7, x7[:, :, 4:-4])

    print("KERNEL_OK")
</pallas_src>

<mosaic_0001>
module attributes {stable_mosaic.version = 11 : i64} {
  func.func @_chomp_kernel(%arg0: i32, %arg1: memref<8x16xf32, #tpu.memory_space<vmem>>, %arg2: memref<8x12xf32, #tpu.memory_space<vmem>>) attributes {dimension_semantics = [#tpu.dimension_semantics<parallel>], iteration_bounds = array<i64: 1>, scalar_prefetch = 0 : i64, scratch_operands = 0 : i64, tpu.core_type = #tpu.core_type<tc>, window_params = [{transform_indices = @transform_0, window_bounds = array<i64: 8, 16>}, {transform_indices = @transform_1, window_bounds = array<i64: 8, 12>}]} {
    %c0 = arith.constant 0 : index
    %c2 = arith.constant 2 : index
    %0 = vector.load %arg1[%c0, %c2] : memref<8x16xf32, #tpu.memory_space<vmem>>, vector<8x12xf32>
    %c0_0 = arith.constant 0 : index
    %c0_1 = arith.constant 0 : index
    %1 = vector.load %arg2[%c0_0, %c0_1] : memref<8x12xf32, #tpu.memory_space<vmem>>, vector<8x12xf32>
    tpu.vector_store %arg2[%c0_0, %c0_1], %0 {strides = array<i32>} : memref<8x12xf32, #tpu.memory_space<vmem>>, vector<8x12xf32>,
    return
  }
  func.func @transform_0(%arg0: i32) -> (i32, i32) {
    %c0_i32 = arith.constant 0 : i32
    %c0_i32_0 = arith.constant 0 : i32
    return %arg0, %c0_i32 : i32, i32
  }
  func.func @transform_1(%arg0: i32) -> (i32, i32) {
    %c0_i32 = arith.constant 0 : i32
    %c0_i32_0 = arith.constant 0 : i32
    return %arg0, %c0_i32 : i32, i32
  }
}

</mosaic_0001>

<llo_original>
// kernel: tpu_custom_call.1
$region0: #{tpu_custom_call.1}
  #allocation0 [shape = 'u32[]', space=smem, size = 0x4, offset = 0x4, fixed_abs, tag = 'smem constant byte address 0x4 - core index']
  #allocation1 [shape = 'u32[144,128]{1,0:T(1,128)}', space=vmem, size = 0x12000, scoped, tag = 'internal scratch']
  %s0 = inlined_call_operand.hbm [shape: f32[8,16], index: 0, kind: input, shape index: {}]
  %s1 = inlined_call_operand.hbm [shape: f32[8,12], index: 1, kind: output, shape index: {}]
  %s2 = sld [smem:[#allocation0]]
  $region18: #{tpu_custom_call.1} parent=0
    _
  %s4 = ssub.s32 1, %s2
  %s5 = scalar_select 0, %s4, %s2
  $region1: #{tpu_custom_call.1} parent=0
    #allocation2 [shape = 'u8[4096]{0}', space=vmem, size = 0x1000, scoped, tag = 'input window, operand 0, single buffered']
    #allocation3 [shape = 's32[1]{0}', space=sflag, size = 0x4, scoped, tag = 'scoped memory for tpu_custom_call.1']
    #allocation4 [shape = 's32[1]{0}', space=sflag, size = 0x4, scoped, tag = 'scoped memory for tpu_custom_call.1']
    #allocation5 [shape = 'u8[4096]{0}', space=vmem, size = 0x1000, scoped, tag = 'output window, operand 0, single buffered']
    %6 = vsyncpa [#allocation3], 0
    %7 = vsyncpa [#allocation4], 0
    // Predicated region
    $region2: #{tpu_custom_call.1} parent=1 // pred_check
      _
    $region3: #{tpu_custom_call.1} parent=1 // pred_check_branch
      %9 = sbr.rel (0) target = $region5
    $region4: #{tpu_custom_call.1} parent=1 // pred_region
      %s11 = ssub.s32 128, 128
      %12 = vsyncadd [#allocation3], %s11
      %s14 = sshll.u32 [#allocation2], 4
      %s15 = int_to_ptr.vmem [resolvable:$true] %s14
      %17 = dma.hbm_to_vmem [thread:$0]  %s0, 128, %s15, [#allocation3]
    $region5: #{tpu_custom_call.1} parent=1 // pred_fallthru
      _
    // Predicated region
    $region6: #{tpu_custom_call.1} parent=1 // pred_check
      _
    $region7: #{tpu_custom_call.1} parent=1 // pred_check_branch
      %19 = sbr.rel (0) target = $region9
    $region8: #{tpu_custom_call.1} parent=1 // pred_region
      %20 = dma.done [#allocation3], 128
    $region9: #{tpu_custom_call.1} parent=1 // pred_fallthru
      _
    %v21 = vld [vmem:[#allocation2] sm:$0xff]
    %23 = vrot.lane.b32.xlu0 %v21, 126
    %v24 = vpop.permute.xlu0 %23
    %vm26 = vcmask 97280
    %27 = vst.msk [vmem:[#allocation5] sm:$0xff] %vm26, %v24
    // Predicated region
    $region10: #{tpu_custom_call.1} parent=1 // pred_check
      _
    $region11: #{tpu_custom_call.1} parent=1 // pred_check_branch
      %29 = sbr.rel (0) target = $region13
    $region12: #{tpu_custom_call.1} parent=1 // pred_region
      %s31 = ssub.s32 128, 128
      %32 = vsyncadd [#allocation4], %s31
      %s34 = sshll.u32 [#allocation5], 4
      %s35 = int_to_ptr.vmem [resolvable:$true] %s34
      %37 = dma.vmem_to_hbm [thread:$0]  %s35, 128, %s1, [#allocation4]
    $region13: #{tpu_custom_call.1} parent=1 // pred_fallthru
      _
    // Predicated region
    $region14: #{tpu_custom_call.1} parent=1 // pred_check
      _
    $region15: #{tpu_custom_call.1} parent=1 // pred_check_branch
      %39 = sbr.rel (0) target = $region17
    $region16: #{tpu_custom_call.1} parent=1 // pred_region
      %40 = dma.done [#allocation4], 128
    $region17: #{tpu_custom_call.1} parent=1 // pred_fallthru
      _
    %41 = vsyncpa [#allocation3], 1
    %42 = vsyncpa [#allocation4], 1

</llo_original>
